<compile_context>
chip_gen: v5e
topology: v5e:2x2
jax: 0.10.0
libtpu: 0.0.40
codegen_flags: <defaults>
</compile_context>

<pallas_src>
import jax
import jax.numpy as jnp
from jax.experimental import pallas as pl
from jax.experimental.pallas import tpu as pltpu

C_IN = 3      # true in/out feature dim of the model
C_PAD = 8     # padded feature lanes for input/output (full-dim block)
TM_MAX = 512  # row tile; sweepable 256/512/1024


def _round_up(x, m):
    return ((x + m - 1) // m) * m


def pointnet_kernel(x_ref,
                    w1_ref, b1_ref,
                    w2_ref, b2_ref,
                    w3_ref, b3_ref,
                    w4_ref, b4_ref,
                    w5_ref, b5_ref,
                    o_ref):
    # bf16 MXU matmuls with f32 accumulation; bias + ReLU in f32 on the VPU.
    h = x_ref[...]                                                   # (TM, 8) f32
    layers = ((w1_ref, b1_ref, True),
              (w2_ref, b2_ref, True),
              (w3_ref, b3_ref, True),
              (w4_ref, b4_ref, True),
              (w5_ref, b5_ref, False))
    for w_ref, b_ref, relu in layers:                                # static unroll
        h = jnp.dot(h.astype(jnp.bfloat16), w_ref[...],
                    preferred_element_type=jnp.float32) + b_ref[...]
        if relu:
            h = jnp.maximum(h, 0.0)
    o_ref[...] = h                                                   # (TM, 8) f32


def pointnet_forward(x, params):
    """x: (B, N, 3) float32 -> (B, N, 3) float32."""
    B, N, C = x.shape
    assert C == C_IN
    M = B * N
    tm = min(TM_MAX, _round_up(max(M, 1), 8))     # don't over-pad tiny inputs
    M_pad = _round_up(M, tm)
    grid_steps = M_pad // tm

    # Flatten points; pad rows to M_pad and feature lanes 3 -> 8 (zeros are inert).
    xf = x.reshape(M, C).astype(jnp.float32)
    xp = jnp.pad(xf, ((0, M_pad - M), (0, C_PAD - C)))

    (w1, b1), (w2, b2), (w3, b3), (w4, b4), (w5, b5) = params

    # Pad layer-1 input dim (3 -> 8) and layer-5 output dim (3 -> 8).
    w1p = jnp.zeros((C_PAD, 64), jnp.float32).at[:C_IN, :].set(w1)
    w5p = jnp.zeros((512, C_PAD), jnp.float32).at[:, :C_IN].set(w5)
    b5p = jnp.zeros((C_PAD,), jnp.float32).at[:C_IN].set(b5)

    wb_flat = []
    for w, b in ((w1p, b1), (w2, b2), (w3, b3), (w4, b4), (w5p, b5p)):
        wb_flat.append(w.astype(jnp.bfloat16))                 # bf16 MXU operands
        wb_flat.append(b.reshape(1, -1).astype(jnp.float32))   # bias stays f32

    in_specs = [pl.BlockSpec((tm, C_PAD), lambda i: (i, 0))]
    for arr in wb_flat:
        # Whole-array block, constant index_map -> DMA'd once, VMEM-resident.
        in_specs.append(pl.BlockSpec(arr.shape, lambda i: (0, 0)))

    out = pl.pallas_call(
        pointnet_kernel,
        out_shape=jax.ShapeDtypeStruct((M_pad, C_PAD), jnp.float32),
        grid_spec=pltpu.PrefetchScalarGridSpec(
            num_scalar_prefetch=0,
            grid=(grid_steps,),
            in_specs=in_specs,
            out_specs=pl.BlockSpec((tm, C_PAD), lambda i: (i, 0)),
        ),
        compiler_params=pltpu.CompilerParams(
            dimension_semantics=("parallel",),
            vmem_limit_bytes=32 * 1024 * 1024,   # generous; kernel needs only a few MiB
        ),
    )(xp, *wb_flat)

    return out[:M, :C_IN].reshape(B, N, C_IN)


def init_params(key):
    """Deterministic init mirroring torch.nn.Linear default (uniform +/- 1/sqrt(fan_in))."""
    dims = [(3, 64), (64, 128), (128, 256), (256, 512), (512, 3)]
    params = []
    for (fan_in, fan_out) in dims:
        key, kw, kb = jax.random.split(key, 3)
        bound = 1.0 / jnp.sqrt(fan_in)
        # PyTorch weight is (out, in); we store transposed (in, out) for x @ W.
        w = jax.random.uniform(kw, (fan_in, fan_out), jnp.float32, -bound, bound)
        b = jax.random.uniform(kb, (fan_out,), jnp.float32, -bound, bound)
        params.append((w, b))
    return params


def pointnet_ref(x, params):
    """Pure-JAX reference mirroring the kernel's bf16-operand / f32-accumulate matmuls."""
    h = x.reshape(-1, C_IN).astype(jnp.float32)
    for i, (w, b) in enumerate(params):
        h = jnp.dot(h.astype(jnp.bfloat16), w.astype(jnp.bfloat16),
                    preferred_element_type=jnp.float32) + b.astype(jnp.float32)
        if i < len(params) - 1:
            h = jnp.maximum(h, 0.0)
    return h.reshape(x.shape[0], x.shape[1], C_IN)


if __name__ == "__main__":
    key = jax.random.PRNGKey(0)
    kp, kx = jax.random.split(key)
    params = init_params(kp)

    B, N = 2, 16
    x = jax.random.normal(kx, (B, N, 3), jnp.float32)

    out = jax.block_until_ready(pointnet_forward(x, params))
    ref = pointnet_ref(x, params)

    assert out.shape == (B, N, 3)
    assert jnp.allclose(out, ref, atol=2e-3, rtol=2e-3), "mismatch vs reference"

    print("KERNEL_OK")
</pallas_src>

<mosaic_0001>
module attributes {stable_mosaic.version = 11 : i64} {
  func.func @pointnet_kernel(%arg0: i32, %arg1: memref<32x8xf32, #tpu.memory_space<vmem>>, %arg2: memref<8x64xbf16, #tpu.memory_space<vmem>>, %arg3: memref<1x64xf32, #tpu.memory_space<vmem>>, %arg4: memref<64x128xbf16, #tpu.memory_space<vmem>>, %arg5: memref<1x128xf32, #tpu.memory_space<vmem>>, %arg6: memref<128x256xbf16, #tpu.memory_space<vmem>>, %arg7: memref<1x256xf32, #tpu.memory_space<vmem>>, %arg8: memref<256x512xbf16, #tpu.memory_space<vmem>>, %arg9: memref<1x512xf32, #tpu.memory_space<vmem>>, %arg10: memref<512x8xbf16, #tpu.memory_space<vmem>>, %arg11: memref<1x8xf32, #tpu.memory_space<vmem>>, %arg12: memref<32x8xf32, #tpu.memory_space<vmem>>) attributes {dimension_semantics = [#tpu.dimension_semantics<parallel>], iteration_bounds = array<i64: 1>, scalar_prefetch = 0 : i64, scratch_operands = 0 : i64, tpu.core_type = #tpu.core_type<tc>, window_params = [{transform_indices = @transform_0, window_bounds = array<i64: 32, 8>}, {pipeline_mode = #tpu.pipeline_mode<synchronous>, transform_indices = @transform_1, window_bounds = array<i64: 8, 64>}, {pipeline_mode = #tpu.pipeline_mode<synchronous>, transform_indices = @transform_2, window_bounds = array<i64: 1, 64>}, {pipeline_mode = #tpu.pipeline_mode<synchronous>, transform_indices = @transform_3, window_bounds = array<i64: 64, 128>}, {pipeline_mode = #tpu.pipeline_mode<synchronous>, transform_indices = @transform_4, window_bounds = array<i64: 1, 128>}, {pipeline_mode = #tpu.pipeline_mode<synchronous>, transform_indices = @transform_5, window_bounds = array<i64: 128, 256>}, {pipeline_mode = #tpu.pipeline_mode<synchronous>, transform_indices = @transform_6, window_bounds = array<i64: 1, 256>}, {pipeline_mode = #tpu.pipeline_mode<synchronous>, transform_indices = @transform_7, window_bounds = array<i64: 256, 512>}, {pipeline_mode = #tpu.pipeline_mode<synchronous>, transform_indices = @transform_8, window_bounds = array<i64: 1, 512>}, {pipeline_mode = #tpu.pipeline_mode<synchronous>, transform_indices = @transform_9, window_bounds = array<i64: 512, 8>}, {pipeline_mode = #tpu.pipeline_mode<synchronous>, transform_indices = @transform_10, window_bounds = array<i64: 1, 8>}, {transform_indices = @transform_11, window_bounds = array<i64: 32, 8>}]} {
    %c0 = arith.constant 0 : index
    %c0_0 = arith.constant 0 : index
    %0 = vector.load %arg1[%c0, %c0_0] : memref<32x8xf32, #tpu.memory_space<vmem>>, vector<32x8xf32>
    %1 = arith.truncf %0 : vector<32x8xf32> to vector<32x8xbf16>
    %c0_1 = arith.constant 0 : index
    %c0_2 = arith.constant 0 : index
    %2 = vector.load %arg2[%c0_1, %c0_2] : memref<8x64xbf16, #tpu.memory_space<vmem>>, vector<8x64xbf16>
    %cst = arith.constant dense<0.000000e+00> : vector<32x64xf32>
    %3 = tpu.matmul %1, %2, %cst {dimension_numbers = #tpu.dot_dimension_numbers<[1], [0], [0], [1], [0, 0, 1, 1], [], []>} : vector<32x8xbf16>, vector<8x64xbf16>, vector<32x64xf32> -> vector<32x64xf32>
    %c0_3 = arith.constant 0 : index
    %c0_4 = arith.constant 0 : index
    %4 = vector.load %arg3[%c0_3, %c0_4] : memref<1x64xf32, #tpu.memory_space<vmem>>, vector<1x64xf32>
    %5 = vector.broadcast %4 : vector<1x64xf32> to vector<32x64xf32>
    %6 = arith.addf %3, %5 : vector<32x64xf32>
    %cst_5 = arith.constant 0.000000e+00 : f32
    %7 = vector.broadcast %cst_5 : f32 to vector<32x64xf32>
    %8 = arith.maximumf %6, %7 : vector<32x64xf32>
    %9 = arith.truncf %8 : vector<32x64xf32> to vector<32x64xbf16>
    %c0_6 = arith.constant 0 : index
    %c0_7 = arith.constant 0 : index
    %10 = vector.load %arg4[%c0_6, %c0_7] : memref<64x128xbf16, #tpu.memory_space<vmem>>, vector<64x128xbf16>
    %cst_8 = arith.constant dense<0.000000e+00> : vector<32x128xf32>
    %11 = tpu.matmul %9, %10, %cst_8 {dimension_numbers = #tpu.dot_dimension_numbers<[1], [0], [0], [1], [0, 0, 1, 1], [], []>} : vector<32x64xbf16>, vector<64x128xbf16>, vector<32x128xf32> -> vector<32x128xf32>
    %c0_9 = arith.constant 0 : index
    %c0_10 = arith.constant 0 : index
    %12 = vector.load %arg5[%c0_9, %c0_10] : memref<1x128xf32, #tpu.memory_space<vmem>>, vector<1x128xf32>
    %13 = vector.broadcast %12 : vector<1x128xf32> to vector<32x128xf32>
    %14 = arith.addf %11, %13 : vector<32x128xf32>
    %cst_11 = arith.constant 0.000000e+00 : f32
    %15 = vector.broadcast %cst_11 : f32 to vector<32x128xf32>
    %16 = arith.maximumf %14, %15 : vector<32x128xf32>
    %17 = arith.truncf %16 : vector<32x128xf32> to vector<32x128xbf16>
    %c0_12 = arith.constant 0 : index
    %c0_13 = arith.constant 0 : index
    %18 = vector.load %arg6[%c0_12, %c0_13] : memref<128x256xbf16, #tpu.memory_space<vmem>>, vector<128x256xbf16>
    %cst_14 = arith.constant dense<0.000000e+00> : vector<32x256xf32>
    %19 = tpu.matmul %17, %18, %cst_14 {dimension_numbers = #tpu.dot_dimension_numbers<[1], [0], [0], [1], [0, 0, 1, 1], [], []>} : vector<32x128xbf16>, vector<128x256xbf16>, vector<32x256xf32> -> vector<32x256xf32>
    %c0_15 = arith.constant 0 : index
    %c0_16 = arith.constant 0 : index
    %20 = vector.load %arg7[%c0_15, %c0_16] : memref<1x256xf32, #tpu.memory_space<vmem>>, vector<1x256xf32>
    %21 = vector.broadcast %20 : vector<1x256xf32> to vector<32x256xf32>
    %22 = arith.addf %19, %21 : vector<32x256xf32>
    %cst_17 = arith.constant 0.000000e+00 : f32
    %23 = vector.broadcast %cst_17 : f32 to vector<32x256xf32>
    %24 = arith.maximumf %22, %23 : vector<32x256xf32>
    %25 = arith.truncf %24 : vector<32x256xf32> to vector<32x256xbf16>
    %c0_18 = arith.constant 0 : index
    %c0_19 = arith.constant 0 : index
    %26 = vector.load %arg8[%c0_18, %c0_19] : memref<256x512xbf16, #tpu.memory_space<vmem>>, vector<256x512xbf16>
    %cst_20 = arith.constant dense<0.000000e+00> : vector<32x512xf32>
    %27 = tpu.matmul %25, %26, %cst_20 {dimension_numbers = #tpu.dot_dimension_numbers<[1], [0], [0], [1], [0, 0, 1, 1], [], []>} : vector<32x256xbf16>, vector<256x512xbf16>, vector<32x512xf32> -> vector<32x512xf32>
    %c0_21 = arith.constant 0 : index
    %c0_22 = arith.constant 0 : index
    %28 = vector.load %arg9[%c0_21, %c0_22] : memref<1x512xf32, #tpu.memory_space<vmem>>, vector<1x512xf32>
    %29 = vector.broadcast %28 : vector<1x512xf32> to vector<32x512xf32>
    %30 = arith.addf %27, %29 : vector<32x512xf32>
    %cst_23 = arith.constant 0.000000e+00 : f32
    %31 = vector.broadcast %cst_23 : f32 to vector<32x512xf32>
    %32 = arith.maximumf %30, %31 : vector<32x512xf32>
    %33 = arith.truncf %32 : vector<32x512xf32> to vector<32x512xbf16>
    %c0_24 = arith.constant 0 : index
    %c0_25 = arith.constant 0 : index
    %34 = vector.load %arg10[%c0_24, %c0_25] : memref<512x8xbf16, #tpu.memory_space<vmem>>, vector<512x8xbf16>
    %cst_26 = arith.constant dense<0.000000e+00> : vector<32x8xf32>
    %35 = tpu.matmul %33, %34, %cst_26 {dimension_numbers = #tpu.dot_dimension_numbers<[1], [0], [0], [1], [0, 0, 1, 1], [], []>} : vector<32x512xbf16>, vector<512x8xbf16>, vector<32x8xf32> -> vector<32x8xf32>
    %c0_27 = arith.constant 0 : index
    %c0_28 = arith.constant 0 : index
    %36 = vector.load %arg11[%c0_27, %c0_28] : memref<1x8xf32, #tpu.memory_space<vmem>>, vector<1x8xf32>
    %37 = vector.broadcast %36 : vector<1x8xf32> to vector<32x8xf32>
    %38 = arith.addf %35, %37 : vector<32x8xf32>
    %c0_29 = arith.constant 0 : index
    %c0_30 = arith.constant 0 : index
    %39 = vector.load %arg12[%c0_29, %c0_30] : memref<32x8xf32, #tpu.memory_space<vmem>>, vector<32x8xf32>
    tpu.vector_store %arg12[%c0_29, %c0_30], %38 {strides = array<i32>} : memref<32x8xf32, #tpu.memory_space<vmem>>, vector<32x8xf32>,
    return
  }
  func.func @transform_0(%arg0: i32) -> (i32, i32) {
    %c0_i32 = arith.constant 0 : i32
    %c0_i32_0 = arith.constant 0 : i32
    return %arg0, %c0_i32 : i32, i32
  }
  func.func @transform_1(%arg0: i32) -> (i32, i32) {
    %c0_i32 = arith.constant 0 : i32
    %c0_i32_0 = arith.constant 0 : i32
    %c0_i32_1 = arith.constant 0 : i32
    return %c0_i32, %c0_i32_0 : i32, i32
  }
  func.func @transform_2(%arg0: i32) -> (i32, i32) {
    %c0_i32 = arith.constant 0 : i32
    %c0_i32_0 = arith.constant 0 : i32
    %c0_i32_1 = arith.constant 0 : i32
    return %c0_i32, %c0_i32_0 : i32, i32
  }
  func.func @transform_3(%arg0: i32) -> (i32, i32) {
    %c0_i32 = arith.constant 0 : i32
    %c0_i32_0 = arith.constant 0 : i32
    %c0_i32_1 = arith.constant 0 : i32
    return %c0_i32, %c0_i32_0 : i32, i32
  }
  func.func @transform_4(%arg0: i32) -> (i32, i32) {
    %c0_i32 = arith.constant 0 : i32
    %c0_i32_0 = arith.constant 0 : i32
    %c0_i32_1 = arith.constant 0 : i32
    return %c0_i32, %c0_i32_0 : i32, i32
  }
  func.func @transform_5(%arg0: i32) -> (i32, i32) {
    %c0_i32 = arith.constant 0 : i32
    %c0_i32_0 = arith.constant 0 : i32
    %c0_i32_1 = arith.constant 0 : i32
    return %c0_i32, %c0_i32_0 : i32, i32
  }
  func.func @transform_6(%arg0: i32) -> (i32, i32) {
    %c0_i32 = arith.constant 0 : i32
    %c0_i32_0 = arith.constant 0 : i32
    %c0_i32_1 = arith.constant 0 : i32
    return %c0_i32, %c0_i32_0 : i32, i32
  }
  func.func @transform_7(%arg0: i32) -> (i32, i32) {
    %c0_i32 = arith.constant 0 : i32
    %c0_i32_0 = arith.constant 0 : i32
    %c0_i32_1 = arith.constant 0 : i32
    return %c0_i32, %c0_i32_0 : i32, i32
  }
  func.func @transform_8(%arg0: i32) -> (i32, i32) {
    %c0_i32 = arith.constant 0 : i32
    %c0_i32_0 = arith.constant 0 : i32
    %c0_i32_1 = arith.constant 0 : i32
    return %c0_i32, %c0_i32_0 : i32, i32
  }
  func.func @transform_9(%arg0: i32) -> (i32, i32) {
    %c0_i32 = arith.constant 0 : i32
    %c0_i32_0 = arith.constant 0 : i32
    %c0_i32_1 = arith.constant 0 : i32
    return %c0_i32, %c0_i32_0 : i32, i32
  }
  func.func @transform_10(%arg0: i32) -> (i32, i32) {
    %c0_i32 = arith.constant 0 : i32
    %c0_i32_0 = arith.constant 0 : i32
    %c0_i32_1 = arith.constant 0 : i32
    return %c0_i32, %c0_i32_0 : i32, i32
  }
  func.func @transform_11(%arg0: i32) -> (i32, i32) {
    %c0_i32 = arith.constant 0 : i32
    %c0_i32_0 = arith.constant 0 : i32
    return %arg0, %c0_i32 : i32, i32
  }
}

</mosaic_0001>

<llo_original>
// kernel: tpu_custom_call.1
$region0: #{tpu_custom_call.1}
  #allocation0 [shape = 'u32[]', space=smem, size = 0x4, offset = 0x4, fixed_abs, tag = 'smem constant byte address 0x4 - core index']
  #allocation1 [shape = 'u32[72,128]{1,0:T(1,128)}', space=vmem, size = 0x9000, scoped, tag = 'internal scratch']
  %s0 = inlined_call_operand.vmem [shape: f32[32,8], index: 0, kind: input, shape index: {}]
  %s1 = inlined_call_operand.vmem [shape: bf16[8,64], index: 1, kind: input, shape index: {}]
  %s2 = inlined_call_operand.vmem [shape: f32[1,64], index: 2, kind: input, shape index: {}]
  %s3 = inlined_call_operand.vmem [shape: bf16[64,128], index: 3, kind: input, shape index: {}]
  %s4 = inlined_call_operand.vmem [shape: f32[1,128], index: 4, kind: input, shape index: {}]
  %s5 = inlined_call_operand.vmem [shape: bf16[128,256], index: 5, kind: input, shape index: {}]
  %s6 = inlined_call_operand.vmem [shape: f32[1,256], index: 6, kind: input, shape index: {}]
  %s7 = inlined_call_operand.hbm [shape: bf16[256,512], index: 7, kind: input, shape index: {}]
  %s8 = inlined_call_operand.vmem [shape: f32[1,512], index: 8, kind: input, shape index: {}]
  %s9 = inlined_call_operand.vmem [shape: bf16[512,8], index: 9, kind: input, shape index: {}]
  %s10 = inlined_call_operand.vmem [shape: f32[1,8], index: 10, kind: input, shape index: {}]
  %s11 = inlined_call_operand.vmem [shape: f32[32,8], index: 11, kind: output, shape index: {}]
  %s12 = sld [smem:[#allocation0]]
  $region58: #{tpu_custom_call.1} parent=0
    _
  %s14 = ssub.s32 1, %s12
  %s15 = scalar_select 0, %s14, %s12
  $region1: #{tpu_custom_call.1} parent=0
    #allocation2 [shape = 'u8[262144]{0}', space=vmem, size = 0x40000, scoped, tag = 'input window, operand 7, single buffered']
    #allocation3 [shape = 's32[1]{0}', space=sflag, size = 0x4, scoped, tag = 'scoped memory for tpu_custom_call.1']
    %16 = vsyncpa [#allocation3], 0
    // Predicated region
    $region2: #{tpu_custom_call.1} parent=1 // pred_check
      _
    $region3: #{tpu_custom_call.1} parent=1 // pred_check_branch
      %18 = sbr.rel (0) target = $region5
    $region4: #{tpu_custom_call.1} parent=1 // pred_region
      _
    $region5: #{tpu_custom_call.1} parent=1 // pred_fallthru
      _
    // Predicated region
    $region6: #{tpu_custom_call.1} parent=1 // pred_check
      _
    $region7: #{tpu_custom_call.1} parent=1 // pred_check_branch
      %20 = sbr.rel (0) target = $region9
    $region8: #{tpu_custom_call.1} parent=1 // pred_region
      _
    $region9: #{tpu_custom_call.1} parent=1 // pred_fallthru
      _
    // Predicated region
    $region10: #{tpu_custom_call.1} parent=1 // pred_check
      _
    $region11: #{tpu_custom_call.1} parent=1 // pred_check_branch
      %22 = sbr.rel (0) target = $region13
    $region12: #{tpu_custom_call.1} parent=1 // pred_region
      _
    $region13: #{tpu_custom_call.1} parent=1 // pred_fallthru
      _
    // Predicated region
    $region14: #{tpu_custom_call.1} parent=1 // pred_check
      _
    $region15: #{tpu_custom_call.1} parent=1 // pred_check_branch
      %24 = sbr.rel (0) target = $region17
    $region16: #{tpu_custom_call.1} parent=1 // pred_region
      _
    $region17: #{tpu_custom_call.1} parent=1 // pred_fallthru
      _
    // Predicated region
    $region18: #{tpu_custom_call.1} parent=1 // pred_check
      _
    $region19: #{tpu_custom_call.1} parent=1 // pred_check_branch
      %26 = sbr.rel (0) target = $region21
    $region20: #{tpu_custom_call.1} parent=1 // pred_region
      _
    $region21: #{tpu_custom_call.1} parent=1 // pred_fallthru
      _
    // Predicated region
    $region22: #{tpu_custom_call.1} parent=1 // pred_check
      _
    $region23: #{tpu_custom_call.1} parent=1 // pred_check_branch
      %28 = sbr.rel (0) target = $region25
    $region24: #{tpu_custom_call.1} parent=1 // pred_region
      _
    $region25: #{tpu_custom_call.1} parent=1 // pred_fallthru
      _
    // Predicated region
    $region26: #{tpu_custom_call.1} parent=1 // pred_check
      _
    $region27: #{tpu_custom_call.1} parent=1 // pred_check_branch
      %30 = sbr.rel (0) target = $region29
    $region28: #{tpu_custom_call.1} parent=1 // pred_region
      _
    $region29: #{tpu_custom_call.1} parent=1 // pred_fallthru
      _
    // Predicated region
    $region30: #{tpu_custom_call.1} parent=1 // pred_check
      _
    $region31: #{tpu_custom_call.1} parent=1 // pred_check_branch
      %32 = sbr.rel (0) target = $region33
    $region32: #{tpu_custom_call.1} parent=1 // pred_region
      %34 = vsyncadd [#allocation3], 0
      %s35 = sshll.u32 %s7, 4
      %s36 = int_to_ptr.hbm [resolvable:$true] %s35
      %s37 = sshll.u32 [#allocation2], 4
      %s38 = int_to_ptr.vmem [resolvable:$true] %s37
      %43 = dma.hbm_to_vmem [thread:$0]  %s36, 8192, %s38, [#allocation3], 256, 256, 16
    $region33: #{tpu_custom_call.1} parent=1 // pred_fallthru
      _
    // Predicated region
    $region34: #{tpu_custom_call.1} parent=1 // pred_check
      _
    $region35: #{tpu_custom_call.1} parent=1 // pred_check_branch
      %45 = sbr.rel (0) target = $region37
    $region36: #{tpu_custom_call.1} parent=1 // pred_region
      _
    $region37: #{tpu_custom_call.1} parent=1 // pred_fallthru
      _
    // Predicated region
    $region38: #{tpu_custom_call.1} parent=1 // pred_check
      _
    $region39: #{tpu_custom_call.1} parent=1 // pred_check_branch
      %47 = sbr.rel (0) target = $region41
    $region40: #{tpu_custom_call.1} parent=1 // pred_region
      _
    $region41: #{tpu_custom_call.1} parent=1 // pred_fallthru
      _
    // Predicated region
    $region42: #{tpu_custom_call.1} parent=1 // pred_check
      _
    $region43: #{tpu_custom_call.1} parent=1 // pred_check_branch
      %49 = sbr.rel (0) target = $region45
    $region44: #{tpu_custom_call.1} parent=1 // pred_region
      _
    $region45: #{tpu_custom_call.1} parent=1 // pred_fallthru
      _
    // Predicated region
    $region46: #{tpu_custom_call.1} parent=1 // pred_check
      _
    $region47: #{tpu_custom_call.1} parent=1 // pred_check_branch
      %51 = sbr.rel (0) target = $region49
    $region48: #{tpu_custom_call.1} parent=1 // pred_region
      %53 = dma.done [#allocation3], 8192
    $region49: #{tpu_custom_call.1} parent=1 // pred_fallthru
      _
    %v55 = vld [vmem:[%s0] sm:$0xff]
    %v56 = vld [vmem:[%s0 + $0x8] sm:$0xff]
    %v57 = vld [vmem:[%s0 + $0x10] sm:$0xff]
    %v58 = vld [vmem:[%s0 + $0x18] sm:$0xff]
    %v59 = vpack.c.bf16 %v56, %v55
    %v60 = vpack.c.bf16 %v58, %v57
    %v61 = vld [vmem:[%s1] sm:$0xf]
    %v62 = vld [vmem:[%s2] sm:$0x1]
    %v64 = vperm.slane %v62, 0
    %vm66 = vcmask 64512
    %v68 = vsel %vm66, %v59, 0
    %v71 = vsel %vm66, %v60, 0
    %vm73 = vcmask 1043456
    %v75 = vsel %vm73, %v61, 0
    %77 = vmatpush.bf16.msra.mxu0 0
    %78 = vmatpush.bf16.msra.mxu0 0
    %79 = vmatpush.bf16.msra.mxu0 0
    %80 = vmatpush.bf16.msra.mxu0 0
    %81 = vmatpush.bf16.msra.mxu0 0
    %82 = vmatpush.bf16.msra.mxu0 0
    %83 = vmatpush.bf16.msra.mxu0 0
    %84 = vmatpush.bf16.msra.mxu0 %v75
    %85 = vmatmul.bf16.gmra.mxu0 %v68
    %v86 = vpop.f32.mrf.mxu0
    %v87 = vadd.f32 %v64, %v86
    %v88 = vpop.f32.mrf.mxu0
    %v89 = vadd.f32 %v64, %v88
    %90 = vmatmul.bf16.gmra.mxu0 %v71
    %v91 = vpop.f32.mrf.mxu0
    %v92 = vadd.f32 %v64, %v91
    %v93 = vpop.f32.mrf.mxu0
    %v94 = vadd.f32 %v64, %v93
    %95 = vdwg.mxu0
    %v96 = vmax.f32 %v87, 0.0
    %v97 = vmax.f32 %v89, 0.0
    %v98 = vmax.f32 %v92, 0.0
    %v99 = vmax.f32 %v94, 0.0
    %v100 = vpack.c.bf16 %v97, %v96
    %v101 = vpack.c.bf16 %v99, %v98
    %v102 = vld [vmem:[%s3] sm:$0xf]
    %v103 = vld [vmem:[%s3 + $0x4] sm:$0xf]
    %v104 = vld [vmem:[%s3 + $0x8] sm:$0xf]
    %v105 = vld [vmem:[%s3 + $0xc] sm:$0xf]
    %v106 = vld [vmem:[%s3 + $0x10] sm:$0xf]
    %v107 = vld [vmem:[%s3 + $0x14] sm:$0xf]
    %v108 = vld [vmem:[%s3 + $0x18] sm:$0xf]
    %v109 = vld [vmem:[%s3 + $0x1c] sm:$0xf]
    %v110 = vld [vmem:[%s4] sm:$0x1]
    %v112 = vperm.slane %v110, 0
    %v122 = vunpack.c.l.b16 %v102
    %v123 = vunpack.c.l.b16 %v103
    %v124 = vunpack.c.l.b16 %v104
    %v125 = vunpack.c.l.b16 %v105
    %v126 = vunpack.c.l.b16 %v106
    %v127 = vunpack.c.l.b16 %v107
    %v128 = vunpack.c.l.b16 %v108
    %v129 = vunpack.c.l.b16 %v109
    %v130 = vpack.c.b16 %v123, %v122
    %v131 = vpack.c.b16 %v125, %v124
    %v132 = vpack.c.b16 %v127, %v126
    %v133 = vpack.c.b16 %v129, %v128
    %vm138 = vcmask 523264
    %v140 = vsel %vm138, %v100, 0
    %v143 = vsel %vm138, %v101, 0
    %145 = vmatpush.bf16.msra.mxu0 0
    %146 = vmatpush.bf16.msra.mxu0 0
    %147 = vmatpush.bf16.msra.mxu0 0
    %148 = vmatpush.bf16.msra.mxu0 0
    %149 = vmatpush.bf16.msra.mxu0 %v133
    %150 = vmatpush.bf16.msra.mxu0 %v132
    %151 = vmatpush.bf16.msra.mxu0 %v131
    %152 = vmatpush.bf16.msra.mxu0 %v130
    %153 = vmatmul.bf16.gmra.mxu0 %v140
    %v154 = vpop.f32.mrf.mxu0
    %v155 = vadd.f32 %v112, %v154
    %v156 = vpop.f32.mrf.mxu0
    %v157 = vadd.f32 %v112, %v156
    %158 = vmatmul.bf16.gmra.mxu0 %v143
    %v159 = vpop.f32.mrf.mxu0
    %v160 = vadd.f32 %v112, %v159
    %v161 = vpop.f32.mrf.mxu0
    %v162 = vadd.f32 %v112, %v161
    %163 = vdwg.mxu0
    %v164 = vmax.f32 %v155, 0.0
    %v165 = vmax.f32 %v157, 0.0
    %v166 = vmax.f32 %v160, 0.0
    %v167 = vmax.f32 %v162, 0.0
    %v168 = vpack.c.bf16 %v165, %v164
    %v169 = vpack.c.bf16 %v167, %v166
    %v170 = vld [vmem:[%s5] sm:$0xff]
    %v171 = vld [vmem:[%s5 + $0x8] sm:$0xff]
    %v172 = vld [vmem:[%s5 + $0x10] sm:$0xff]
    %v173 = vld [vmem:[%s5 + $0x18] sm:$0xff]
    %v174 = vld [vmem:[%s5 + $0x20] sm:$0xff]
    %v175 = vld [vmem:[%s5 + $0x28] sm:$0xff]
    %v176 = vld [vmem:[%s5 + $0x30] sm:$0xff]
    %v177 = vld [vmem:[%s5 + $0x38] sm:$0xff]
    %v178 = vld [vmem:[%s5 + $0x40] sm:$0xff]
    %v179 = vld [vmem:[%s5 + $0x48] sm:$0xff]
    %v180 = vld [vmem:[%s5 + $0x50] sm:$0xff]
    %v181 = vld [vmem:[%s5 + $0x58] sm:$0xff]
    %v182 = vld [vmem:[%s5 + $0x60] sm:$0xff]
    %v183 = vld [vmem:[%s5 + $0x68] sm:$0xff]
    %v184 = vld [vmem:[%s5 + $0x70] sm:$0xff]
    %v185 = vld [vmem:[%s5 + $0x78] sm:$0xff]
    %v186 = vld [vmem:[%s6] sm:$0x3]
    %v188 = vperm.slane %v186, 0
    %v189 = vperm.slane %v186, 1
    %v208 = vunpack.c.l.b16 %v170
    %v209 = vunpack.c.h.b16 %v170
    %v210 = vunpack.c.l.b16 %v171
    %v211 = vunpack.c.h.b16 %v171
    %v212 = vunpack.c.l.b16 %v172
    %v213 = vunpack.c.h.b16 %v172
    %v214 = vunpack.c.l.b16 %v173
    %v215 = vunpack.c.h.b16 %v173
    %v216 = vunpack.c.l.b16 %v174
    %v217 = vunpack.c.h.b16 %v174
    %v218 = vunpack.c.l.b16 %v175
    %v219 = vunpack.c.h.b16 %v175
    %v220 = vunpack.c.l.b16 %v176
    %v221 = vunpack.c.h.b16 %v176
    %v222 = vunpack.c.l.b16 %v177
    %v223 = vunpack.c.h.b16 %v177
    %v224 = vunpack.c.l.b16 %v178
    %v225 = vunpack.c.h.b16 %v178
    %v226 = vunpack.c.l.b16 %v179
    %v227 = vunpack.c.h.b16 %v179
    %v228 = vunpack.c.l.b16 %v180
    %v229 = vunpack.c.h.b16 %v180
    %v230 = vunpack.c.l.b16 %v181
    %v231 = vunpack.c.h.b16 %v181
    %v232 = vunpack.c.l.b16 %v182
    %v233 = vunpack.c.h.b16 %v182
    %v234 = vunpack.c.l.b16 %v183
    %v235 = vunpack.c.h.b16 %v183
    %v236 = vunpack.c.l.b16 %v184
    %v237 = vunpack.c.h.b16 %v184
    %v238 = vunpack.c.l.b16 %v185
    %v239 = vunpack.c.h.b16 %v185
    %v240 = vpack.c.b16 %v210, %v208
    %v241 = vpack.c.b16 %v211, %v209
    %v242 = vpack.c.b16 %v214, %v212
    %v243 = vpack.c.b16 %v215, %v213
    %v244 = vpack.c.b16 %v218, %v216
    %v245 = vpack.c.b16 %v219, %v217
    %v246 = vpack.c.b16 %v222, %v220
    %v247 = vpack.c.b16 %v223, %v221
    %v248 = vpack.c.b16 %v226, %v224
    %v249 = vpack.c.b16 %v227, %v225
    %v250 = vpack.c.b16 %v230, %v228
    %v251 = vpack.c.b16 %v231, %v229
    %v252 = vpack.c.b16 %v234, %v232
    %v253 = vpack.c.b16 %v235, %v233
    %v254 = vpack.c.b16 %v238, %v236
    %v255 = vpack.c.b16 %v239, %v237
    %272 = vmatpush.bf16.msra.mxu0 %v254
    %273 = vmatpush.bf16.msra.mxu0 %v252
    %274 = vmatpush.bf16.msra.mxu0 %v250
    %275 = vmatpush.bf16.msra.mxu0 %v248
    %276 = vmatpush.bf16.msra.mxu0 %v246
    %277 = vmatpush.bf16.msra.mxu0 %v244
    %278 = vmatpush.bf16.msra.mxu0 %v242
    %279 = vmatpush.bf16.msra.mxu0 %v240
    %280 = vmatmul.bf16.gmra.mxu0 %v168
    %v281 = vpop.f32.mrf.mxu0
    %v282 = vadd.f32 %v188, %v281
    %v283 = vpop.f32.mrf.mxu0
    %v284 = vadd.f32 %v188, %v283
    %285 = vmatmul.bf16.gmra.mxu0 %v169
    %v286 = vpop.f32.mrf.mxu0
    %v287 = vadd.f32 %v188, %v286
    %v288 = vpop.f32.mrf.mxu0
    %v289 = vadd.f32 %v188, %v288
    %290 = vdwg.mxu0
    %291 = vmatpush.bf16.msra.mxu0 %v255
    %292 = vmatpush.bf16.msra.mxu0 %v253
    %293 = vmatpush.bf16.msra.mxu0 %v251
    %294 = vmatpush.bf16.msra.mxu0 %v249
    %295 = vmatpush.bf16.msra.mxu0 %v247
    %296 = vmatpush.bf16.msra.mxu0 %v245
    %297 = vmatpush.bf16.msra.mxu0 %v243
    %298 = vmatpush.bf16.msra.mxu0 %v241
    %299 = vmatmul.bf16.gmra.mxu0 %v168
    %v300 = vpop.f32.mrf.mxu0
    %v301 = vadd.f32 %v189, %v300
    %v302 = vpop.f32.mrf.mxu0
    %v303 = vadd.f32 %v189, %v302
    %304 = vmatmul.bf16.gmra.mxu0 %v169
    %v305 = vpop.f32.mrf.mxu0
    %v306 = vadd.f32 %v189, %v305
    %v307 = vpop.f32.mrf.mxu0
    %v308 = vadd.f32 %v189, %v307
    %309 = vdwg.mxu0
    %v310 = vmax.f32 %v282, 0.0
    %v311 = vmax.f32 %v301, 0.0
    %v312 = vmax.f32 %v284, 0.0
    %v313 = vmax.f32 %v303, 0.0
    %v314 = vmax.f32 %v287, 0.0
    %v315 = vmax.f32 %v306, 0.0
    %v316 = vmax.f32 %v289, 0.0
    %v317 = vmax.f32 %v308, 0.0
    %v318 = vpack.c.bf16 %v312, %v310
    %v319 = vpack.c.bf16 %v313, %v311
    %v320 = vpack.c.bf16 %v316, %v314
    %v321 = vpack.c.bf16 %v317, %v315
    %v322 = vld [vmem:[#allocation2] sm:$0xff]
    %v323 = vld [vmem:[#allocation2 + $0x8] sm:$0xff]
    %v324 = vld [vmem:[#allocation2 + $0x10] sm:$0xff]
    %v325 = vld [vmem:[#allocation2 + $0x18] sm:$0xff]
    %v326 = vld [vmem:[#allocation2 + $0x20] sm:$0xff]
    %v327 = vld [vmem:[#allocation2 + $0x28] sm:$0xff]
    %v328 = vld [vmem:[#allocation2 + $0x30] sm:$0xff]
    %v329 = vld [vmem:[#allocation2 + $0x38] sm:$0xff]
    %v330 = vld [vmem:[#allocation2 + $0x40] sm:$0xff]
    %v331 = vld [vmem:[#allocation2 + $0x48] sm:$0xff]
    %v332 = vld [vmem:[#allocation2 + $0x50] sm:$0xff]
    %v333 = vld [vmem:[#allocation2 + $0x58] sm:$0xff]
    %v334 = vld [vmem:[#allocation2 + $0x60] sm:$0xff]
    %v335 = vld [vmem:[#allocation2 + $0x68] sm:$0xff]
    %v336 = vld [vmem:[#allocation2 + $0x70] sm:$0xff]
    %v337 = vld [vmem:[#allocation2 + $0x78] sm:$0xff]
    %v338 = vld [vmem:[#allocation2 + $0x80] sm:$0xff]
    %v339 = vld [vmem:[#allocation2 + $0x88] sm:$0xff]
    %v340 = vld [vmem:[#allocation2 + $0x90] sm:$0xff]
    %v341 = vld [vmem:[#allocation2 + $0x98] sm:$0xff]
    %v342 = vld [vmem:[#allocation2 + $0xa0] sm:$0xff]
    %v343 = vld [vmem:[#allocation2 + $0xa8] sm:$0xff]
    %v344 = vld [vmem:[#allocation2 + $0xb0] sm:$0xff]
    %v345 = vld [vmem:[#allocation2 + $0xb8] sm:$0xff]
    %v346 = vld [vmem:[#allocation2 + $0xc0] sm:$0xff]
    %v347 = vld [vmem:[#allocation2 + $0xc8] sm:$0xff]
    %v348 = vld [vmem:[#allocation2 + $0xd0] sm:$0xff]
    %v349 = vld [vmem:[#allocation2 + $0xd8] sm:$0xff]
    %v350 = vld [vmem:[#allocation2 + $0xe0] sm:$0xff]
    %v351 = vld [vmem:[#allocation2 + $0xe8] sm:$0xff]
    %v352 = vld [vmem:[#allocation2 + $0xf0] sm:$0xff]
    %v353 = vld [vmem:[#allocation2 + $0xf8] sm:$0xff]
    %v354 = vld [vmem:[#allocation2 + $0x100] sm:$0xff]
    %v355 = vld [vmem:[#allocation2 + $0x108] sm:$0xff]
    %v356 = vld [vmem:[#allocation2 + $0x110] sm:$0xff]
    %v357 = vld [vmem:[#allocation2 + $0x118] sm:$0xff]
    %v358 = vld [vmem:[#allocation2 + $0x120] sm:$0xff]
    %v359 = vld [vmem:[#allocation2 + $0x128] sm:$0xff]
    %v360 = vld [vmem:[#allocation2 + $0x130] sm:$0xff]
    %v361 = vld [vmem:[#allocation2 + $0x138] sm:$0xff]
    %v362 = vld [vmem:[#allocation2 + $0x140] sm:$0xff]
    %v363 = vld [vmem:[#allocation2 + $0x148] sm:$0xff]
    %v364 = vld [vmem:[#allocation2 + $0x150] sm:$0xff]
    %v365 = vld [vmem:[#allocation2 + $0x158] sm:$0xff]
    %v366 = vld [vmem:[#allocation2 + $0x160] sm:$0xff]
    %v367 = vld [vmem:[#allocation2 + $0x168] sm:$0xff]
    %v368 = vld [vmem:[#allocation2 + $0x170] sm:$0xff]
    %v369 = vld [vmem:[#allocation2 + $0x178] sm:$0xff]
    %v370 = vld [vmem:[#allocation2 + $0x180] sm:$0xff]
    %v371 = vld [vmem:[#allocation2 + $0x188] sm:$0xff]
    %v372 = vld [vmem:[#allocation2 + $0x190] sm:$0xff]
    %v373 = vld [vmem:[#allocation2 + $0x198] sm:$0xff]
    %v374 = vld [vmem:[#allocation2 + $0x1a0] sm:$0xff]
    %v375 = vld [vmem:[#allocation2 + $0x1a8] sm:$0xff]
    %v376 = vld [vmem:[#allocation2 + $0x1b0] sm:$0xff]
    %v377 = vld [vmem:[#allocation2 + $0x1b8] sm:$0xff]
    %v378 = vld [vmem:[#allocation2 + $0x1c0] sm:$0xff]
    %v379 = vld [vmem:[#allocation2 + $0x1c8] sm:$0xff]
    %v380 = vld [vmem:[#allocation2 + $0x1d0] sm:$0xff]
    %v381 = vld [vmem:[#allocation2 + $0x1d8] sm:$0xff]
    %v382 = vld [vmem:[#allocation2 + $0x1e0] sm:$0xff]
    %v383 = vld [vmem:[#allocation2 + $0x1e8] sm:$0xff]
    %v384 = vld [vmem:[#allocation2 + $0x1f0] sm:$0xff]
    %v385 = vld [vmem:[#allocation2 + $0x1f8] sm:$0xff]
    %v386 = vld [vmem:[%s8] sm:$0xf]
    %v388 = vperm.slane %v386, 0
    %v389 = vperm.slane %v386, 1
    %v390 = vperm.slane %v386, 2
    %v391 = vperm.slane %v386, 3
    %v460 = vunpack.c.l.b16 %v322
    %v461 = vunpack.c.h.b16 %v322
    %v462 = vunpack.c.l.b16 %v323
    %v463 = vunpack.c.h.b16 %v323
    %v464 = vunpack.c.l.b16 %v324
    %v465 = vunpack.c.h.b16 %v324
    %v466 = vunpack.c.l.b16 %v325
    %v467 = vunpack.c.h.b16 %v325
    %v468 = vunpack.c.l.b16 %v326
    %v469 = vunpack.c.h.b16 %v326
    %v470 = vunpack.c.l.b16 %v327
    %v471 = vunpack.c.h.b16 %v327
    %v472 = vunpack.c.l.b16 %v328
    %v473 = vunpack.c.h.b16 %v328
    %v474 = vunpack.c.l.b16 %v329
    %v475 = vunpack.c.h.b16 %v329
    %v476 = vunpack.c.l.b16 %v330
    %v477 = vunpack.c.h.b16 %v330
    %v478 = vunpack.c.l.b16 %v331
    %v479 = vunpack.c.h.b16 %v331
    %v480 = vunpack.c.l.b16 %v332
    %v481 = vunpack.c.h.b16 %v332
    %v482 = vunpack.c.l.b16 %v333
    %v483 = vunpack.c.h.b16 %v333
    %v484 = vunpack.c.l.b16 %v334
    %v485 = vunpack.c.h.b16 %v334
    %v486 = vunpack.c.l.b16 %v335
    %v487 = vunpack.c.h.b16 %v335
    %v488 = vunpack.c.l.b16 %v336
    %v489 = vunpack.c.h.b16 %v336
    %v490 = vunpack.c.l.b16 %v337
    %v491 = vunpack.c.h.b16 %v337
    %v492 = vunpack.c.l.b16 %v338
    %v493 = vunpack.c.h.b16 %v338
    %v494 = vunpack.c.l.b16 %v339
    %v495 = vunpack.c.h.b16 %v339
    %v496 = vunpack.c.l.b16 %v340
    %v497 = vunpack.c.h.b16 %v340
    %v498 = vunpack.c.l.b16 %v341
    %v499 = vunpack.c.h.b16 %v341
    %v500 = vunpack.c.l.b16 %v342
    %v501 = vunpack.c.h.b16 %v342
    %v502 = vunpack.c.l.b16 %v343
    %v503 = vunpack.c.h.b16 %v343
    %v504 = vunpack.c.l.b16 %v344
    %v505 = vunpack.c.h.b16 %v344
    %v506 = vunpack.c.l.b16 %v345
    %v507 = vunpack.c.h.b16 %v345
    %v508 = vunpack.c.l.b16 %v346
    %v509 = vunpack.c.h.b16 %v346
    %v510 = vunpack.c.l.b16 %v347
    %v511 = vunpack.c.h.b16 %v347
    %v512 = vunpack.c.l.b16 %v348
    %v513 = vunpack.c.h.b16 %v348
    %v514 = vunpack.c.l.b16 %v349
    %v515 = vunpack.c.h.b16 %v349
    %v516 = vunpack.c.l.b16 %v350
    %v517 = vunpack.c.h.b16 %v350
    %v518 = vunpack.c.l.b16 %v351
    %v519 = vunpack.c.h.b16 %v351
    %v520 = vunpack.c.l.b16 %v352
    %v521 = vunpack.c.h.b16 %v352
    %v522 = vunpack.c.l.b16 %v353
    %v523 = vunpack.c.h.b16 %v353
    %v524 = vunpack.c.l.b16 %v354
    %v525 = vunpack.c.h.b16 %v354
    %v526 = vunpack.c.l.b16 %v355
    %v527 = vunpack.c.h.b16 %v355
    %v528 = vunpack.c.l.b16 %v356
    %v529 = vunpack.c.h.b16 %v356
    %v530 = vunpack.c.l.b16 %v357
    %v531 = vunpack.c.h.b16 %v357
    %v532 = vunpack.c.l.b16 %v358
    %v533 = vunpack.c.h.b16 %v358
    %v534 = vunpack.c.l.b16 %v359
    %v535 = vunpack.c.h.b16 %v359
    %v536 = vunpack.c.l.b16 %v360
    %v537 = vunpack.c.h.b16 %v360
    %v538 = vunpack.c.l.b16 %v361
    %v539 = vunpack.c.h.b16 %v361
    %v540 = vunpack.c.l.b16 %v362
    %v541 = vunpack.c.h.b16 %v362
    %v542 = vunpack.c.l.b16 %v363
    %v543 = vunpack.c.h.b16 %v363
    %v544 = vunpack.c.l.b16 %v364
    %v545 = vunpack.c.h.b16 %v364
    %v546 = vunpack.c.l.b16 %v365
    %v547 = vunpack.c.h.b16 %v365
    %v548 = vunpack.c.l.b16 %v366
    %v549 = vunpack.c.h.b16 %v366
    %v550 = vunpack.c.l.b16 %v367
    %v551 = vunpack.c.h.b16 %v367
    %v552 = vunpack.c.l.b16 %v368
    %v553 = vunpack.c.h.b16 %v368
    %v554 = vunpack.c.l.b16 %v369
    %v555 = vunpack.c.h.b16 %v369
    %v556 = vunpack.c.l.b16 %v370
    %v557 = vunpack.c.h.b16 %v370
    %v558 = vunpack.c.l.b16 %v371
    %v559 = vunpack.c.h.b16 %v371
    %v560 = vunpack.c.l.b16 %v372
    %v561 = vunpack.c.h.b16 %v372
    %v562 = vunpack.c.l.b16 %v373
    %v563 = vunpack.c.h.b16 %v373
    %v564 = vunpack.c.l.b16 %v374
    %v565 = vunpack.c.h.b16 %v374
    %v566 = vunpack.c.l.b16 %v375
    %v567 = vunpack.c.h.b16 %v375
    %v568 = vunpack.c.l.b16 %v376
    %v569 = vunpack.c.h.b16 %v376
    %v570 = vunpack.c.l.b16 %v377
    %v571 = vunpack.c.h.b16 %v377
    %v572 = vunpack.c.l.b16 %v378
    %v573 = vunpack.c.h.b16 %v378
    %v574 = vunpack.c.l.b16 %v379
    %v575 = vunpack.c.h.b16 %v379
    %v576 = vunpack.c.l.b16 %v380
    %v577 = vunpack.c.h.b16 %v380
    %v578 = vunpack.c.l.b16 %v381
    %v579 = vunpack.c.h.b16 %v381
    %v580 = vunpack.c.l.b16 %v382
    %v581 = vunpack.c.h.b16 %v382
    %v582 = vunpack.c.l.b16 %v383
    %v583 = vunpack.c.h.b16 %v383
    %v584 = vunpack.c.l.b16 %v384
    %v585 = vunpack.c.h.b16 %v384
    %v586 = vunpack.c.l.b16 %v385
    %v587 = vunpack.c.h.b16 %v385
    %v588 = vpack.c.b16 %v464, %v460
    %v589 = vpack.c.b16 %v465, %v461
    %v590 = vpack.c.b16 %v466, %v462
    %v591 = vpack.c.b16 %v467, %v463
    %v592 = vpack.c.b16 %v472, %v468
    %v593 = vpack.c.b16 %v473, %v469
    %v594 = vpack.c.b16 %v474, %v470
    %v595 = vpack.c.b16 %v475, %v471
    %v596 = vpack.c.b16 %v480, %v476
    %v597 = vpack.c.b16 %v481, %v477
    %v598 = vpack.c.b16 %v482, %v478
    %v599 = vpack.c.b16 %v483, %v479
    %v600 = vpack.c.b16 %v488, %v484
    %v601 = vpack.c.b16 %v489, %v485
    %v602 = vpack.c.b16 %v490, %v486
    %v603 = vpack.c.b16 %v491, %v487
    %v604 = vpack.c.b16 %v496, %v492
    %v605 = vpack.c.b16 %v497, %v493
    %v606 = vpack.c.b16 %v498, %v494
    %v607 = vpack.c.b16 %v499, %v495
    %v608 = vpack.c.b16 %v504, %v500
    %v609 = vpack.c.b16 %v505, %v501
    %v610 = vpack.c.b16 %v506, %v502
    %v611 = vpack.c.b16 %v507, %v503
    %v612 = vpack.c.b16 %v512, %v508
    %v613 = vpack.c.b16 %v513, %v509
    %v614 = vpack.c.b16 %v514, %v510
    %v615 = vpack.c.b16 %v515, %v511
    %v616 = vpack.c.b16 %v520, %v516
    %v617 = vpack.c.b16 %v521, %v517
    %v618 = vpack.c.b16 %v522, %v518
    %v619 = vpack.c.b16 %v523, %v519
    %v620 = vpack.c.b16 %v528, %v524
    %v621 = vpack.c.b16 %v529, %v525
    %v622 = vpack.c.b16 %v530, %v526
    %v623 = vpack.c.b16 %v531, %v527
    %v624 = vpack.c.b16 %v536, %v532
    %v625 = vpack.c.b16 %v537, %v533
    %v626 = vpack.c.b16 %v538, %v534
    %v627 = vpack.c.b16 %v539, %v535
    %v628 = vpack.c.b16 %v544, %v540
    %v629 = vpack.c.b16 %v545, %v541
    %v630 = vpack.c.b16 %v546, %v542
    %v631 = vpack.c.b16 %v547, %v543
    %v632 = vpack.c.b16 %v552, %v548
    %v633 = vpack.c.b16 %v553, %v549
    %v634 = vpack.c.b16 %v554, %v550
    %v635 = vpack.c.b16 %v555, %v551
    %v636 = vpack.c.b16 %v560, %v556
    %v637 = vpack.c.b16 %v561, %v557
    %v638 = vpack.c.b16 %v562, %v558
    %v639 = vpack.c.b16 %v563, %v559
    %v640 = vpack.c.b16 %v568, %v564
    %v641 = vpack.c.b16 %v569, %v565
    %v642 = vpack.c.b16 %v570, %v566
    %v643 = vpack.c.b16 %v571, %v567
    %v644 = vpack.c.b16 %v576, %v572
    %v645 = vpack.c.b16 %v577, %v573
    %v646 = vpack.c.b16 %v578, %v574
    %v647 = vpack.c.b16 %v579, %v575
    %v648 = vpack.c.b16 %v584, %v580
    %v649 = vpack.c.b16 %v585, %v581
    %v650 = vpack.c.b16 %v586, %v582
    %v651 = vpack.c.b16 %v587, %v583
    %716 = vmatpush.bf16.msra.mxu0 %v616
    %717 = vmatpush.bf16.msra.mxu0 %v612
    %718 = vmatpush.bf16.msra.mxu0 %v608
    %719 = vmatpush.bf16.msra.mxu0 %v604
    %720 = vmatpush.bf16.msra.mxu0 %v600
    %721 = vmatpush.bf16.msra.mxu0 %v596
    %722 = vmatpush.bf16.msra.mxu0 %v592
    %723 = vmatpush.bf16.msra.mxu0 %v588
    %724 = vmatmul.bf16.gmra.mxu0 %v318
    %v725 = vpop.f32.mrf.mxu0
    %v726 = vadd.f32 %v388, %v725
    %v727 = vpop.f32.mrf.mxu0
    %v728 = vadd.f32 %v388, %v727
    %729 = vmatmul.bf16.gmra.mxu0 %v320
    %v730 = vpop.f32.mrf.mxu0
    %v731 = vadd.f32 %v388, %v730
    %v732 = vpop.f32.mrf.mxu0
    %v733 = vadd.f32 %v388, %v732
    %734 = vdwg.mxu0
    %735 = vmatpush.bf16.msra.mxu0 %v648
    %736 = vmatpush.bf16.msra.mxu0 %v644
    %737 = vmatpush.bf16.msra.mxu0 %v640
    %738 = vmatpush.bf16.msra.mxu0 %v636
    %739 = vmatpush.bf16.msra.mxu0 %v632
    %740 = vmatpush.bf16.msra.mxu0 %v628
    %741 = vmatpush.bf16.msra.mxu0 %v624
    %742 = vmatpush.bf16.msra.mxu0 %v620
    %743 = vmatmul.bf16.gmra.mxu0 %v319
    %v744 = vpop.f32.mrf.mxu0
    %v745 = vadd.f32 %v726, %v744
    %v746 = vpop.f32.mrf.mxu0
    %v747 = vadd.f32 %v728, %v746
    %748 = vmatmul.bf16.gmra.mxu0 %v321
    %v749 = vpop.f32.mrf.mxu0
    %v750 = vadd.f32 %v731, %v749
    %v751 = vpop.f32.mrf.mxu0
    %v752 = vadd.f32 %v733, %v751
    %753 = vdwg.mxu0
    %754 = vmatpush.bf16.msra.mxu0 %v617
    %755 = vmatpush.bf16.msra.mxu0 %v613
    %756 = vmatpush.bf16.msra.mxu0 %v609
    %757 = vmatpush.bf16.msra.mxu0 %v605
    %758 = vmatpush.bf16.msra.mxu0 %v601
    %759 = vmatpush.bf16.msra.mxu0 %v597
    %760 = vmatpush.bf16.msra.mxu0 %v593
    %761 = vmatpush.bf16.msra.mxu0 %v589
    %762 = vmatmul.bf16.gmra.mxu0 %v318
    %v763 = vpop.f32.mrf.mxu0
    %v764 = vadd.f32 %v389, %v763
    %v765 = vpop.f32.mrf.mxu0
    %v766 = vadd.f32 %v389, %v765
    %767 = vmatmul.bf16.gmra.mxu0 %v320
    %v768 = vpop.f32.mrf.mxu0
    %v769 = vadd.f32 %v389, %v768
    %v770 = vpop.f32.mrf.mxu0
    %v771 = vadd.f32 %v389, %v770
    %772 = vdwg.mxu0
    %773 = vmatpush.bf16.msra.mxu0 %v649
    %774 = vmatpush.bf16.msra.mxu0 %v645
    %775 = vmatpush.bf16.msra.mxu0 %v641
    %776 = vmatpush.bf16.msra.mxu0 %v637
    %777 = vmatpush.bf16.msra.mxu0 %v633
    %778 = vmatpush.bf16.msra.mxu0 %v629
    %779 = vmatpush.bf16.msra.mxu0 %v625
    %780 = vmatpush.bf16.msra.mxu0 %v621
    %781 = vmatmul.bf16.gmra.mxu0 %v319
    %v782 = vpop.f32.mrf.mxu0
    %v783 = vadd.f32 %v764, %v782
    %v784 = vpop.f32.mrf.mxu0
    %v785 = vadd.f32 %v766, %v784
    %786 = vmatmul.bf16.gmra.mxu0 %v321
    %v787 = vpop.f32.mrf.mxu0
    %v788 = vadd.f32 %v769, %v787
    %v789 = vpop.f32.mrf.mxu0
    %v790 = vadd.f32 %v771, %v789
    %791 = vdwg.mxu0
    %792 = vmatpush.bf16.msra.mxu0 %v618
    %793 = vmatpush.bf16.msra.mxu0 %v614
    %794 = vmatpush.bf16.msra.mxu0 %v610
    %795 = vmatpush.bf16.msra.mxu0 %v606
    %796 = vmatpush.bf16.msra.mxu0 %v602
    %797 = vmatpush.bf16.msra.mxu0 %v598
    %798 = vmatpush.bf16.msra.mxu0 %v594
    %799 = vmatpush.bf16.msra.mxu0 %v590
    %800 = vmatmul.bf16.gmra.mxu0 %v318
    %v801 = vpop.f32.mrf.mxu0
    %v802 = vadd.f32 %v390, %v801
    %v803 = vpop.f32.mrf.mxu0
    %v804 = vadd.f32 %v390, %v803
    %805 = vmatmul.bf16.gmra.mxu0 %v320
    %v806 = vpop.f32.mrf.mxu0
    %v807 = vadd.f32 %v390, %v806
    %v808 = vpop.f32.mrf.mxu0
    %v809 = vadd.f32 %v390, %v808
    %810 = vdwg.mxu0
    %811 = vmatpush.bf16.msra.mxu0 %v650
    %812 = vmatpush.bf16.msra.mxu0 %v646
    %813 = vmatpush.bf16.msra.mxu0 %v642
    %814 = vmatpush.bf16.msra.mxu0 %v638
    %815 = vmatpush.bf16.msra.mxu0 %v634
    %816 = vmatpush.bf16.msra.mxu0 %v630
    %817 = vmatpush.bf16.msra.mxu0 %v626
    %818 = vmatpush.bf16.msra.mxu0 %v622
    %819 = vmatmul.bf16.gmra.mxu0 %v319
    %v820 = vpop.f32.mrf.mxu0
    %v821 = vadd.f32 %v802, %v820
    %v822 = vpop.f32.mrf.mxu0
    %v823 = vadd.f32 %v804, %v822
    %824 = vmatmul.bf16.gmra.mxu0 %v321
    %v825 = vpop.f32.mrf.mxu0
    %v826 = vadd.f32 %v807, %v825
    %v827 = vpop.f32.mrf.mxu0
    %v828 = vadd.f32 %v809, %v827
    %829 = vdwg.mxu0
    %830 = vmatpush.bf16.msra.mxu0 %v619
    %831 = vmatpush.bf16.msra.mxu0 %v615
    %832 = vmatpush.bf16.msra.mxu0 %v611
    %833 = vmatpush.bf16.msra.mxu0 %v607
    %834 = vmatpush.bf16.msra.mxu0 %v603
    %835 = vmatpush.bf16.msra.mxu0 %v599
    %836 = vmatpush.bf16.msra.mxu0 %v595
    %837 = vmatpush.bf16.msra.mxu0 %v591
    %838 = vmatmul.bf16.gmra.mxu0 %v318
    %v839 = vpop.f32.mrf.mxu0
    %v840 = vadd.f32 %v391, %v839
    %v841 = vpop.f32.mrf.mxu0
    %v842 = vadd.f32 %v391, %v841
    %843 = vmatmul.bf16.gmra.mxu0 %v320
    %v844 = vpop.f32.mrf.mxu0
    %v845 = vadd.f32 %v391, %v844
    %v846 = vpop.f32.mrf.mxu0
    %v847 = vadd.f32 %v391, %v846
    %848 = vdwg.mxu0
    %849 = vmatpush.bf16.msra.mxu0 %v651
    %850 = vmatpush.bf16.msra.mxu0 %v647
    %851 = vmatpush.bf16.msra.mxu0 %v643
    %852 = vmatpush.bf16.msra.mxu0 %v639
    %853 = vmatpush.bf16.msra.mxu0 %v635
    %854 = vmatpush.bf16.msra.mxu0 %v631
    %855 = vmatpush.bf16.msra.mxu0 %v627
    %856 = vmatpush.bf16.msra.mxu0 %v623
    %857 = vmatmul.bf16.gmra.mxu0 %v319
    %v858 = vpop.f32.mrf.mxu0
    %v859 = vadd.f32 %v840, %v858
    %v860 = vpop.f32.mrf.mxu0
    %v861 = vadd.f32 %v842, %v860
    %862 = vmatmul.bf16.gmra.mxu0 %v321
    %v863 = vpop.f32.mrf.mxu0
    %v864 = vadd.f32 %v845, %v863
    %v865 = vpop.f32.mrf.mxu0
    %v866 = vadd.f32 %v847, %v865
    %867 = vdwg.mxu0
    %v868 = vmax.f32 %v745, 0.0
    %v869 = vmax.f32 %v783, 0.0
    %v870 = vmax.f32 %v821, 0.0
    %v871 = vmax.f32 %v859, 0.0
    %v872 = vmax.f32 %v747, 0.0
    %v873 = vmax.f32 %v785, 0.0
    %v874 = vmax.f32 %v823, 0.0
    %v875 = vmax.f32 %v861, 0.0
    %v876 = vmax.f32 %v750, 0.0
    %v877 = vmax.f32 %v788, 0.0
    %v878 = vmax.f32 %v826, 0.0
    %v879 = vmax.f32 %v864, 0.0
    %v880 = vmax.f32 %v752, 0.0
    %v881 = vmax.f32 %v790, 0.0
    %v882 = vmax.f32 %v828, 0.0
    %v883 = vmax.f32 %v866, 0.0
    %v884 = vpack.c.bf16 %v872, %v868
    %v885 = vpack.c.bf16 %v873, %v869
    %v886 = vpack.c.bf16 %v874, %v870
    %v887 = vpack.c.bf16 %v875, %v871
    %v888 = vpack.c.bf16 %v880, %v876
    %v889 = vpack.c.bf16 %v881, %v877
    %v890 = vpack.c.bf16 %v882, %v878
    %v891 = vpack.c.bf16 %v883, %v879
    %v892 = vld [vmem:[%s9] sm:$0xf]
    %v893 = vld [vmem:[%s9 + $0x4] sm:$0xf]
    %v894 = vld [vmem:[%s9 + $0x8] sm:$0xf]
    %v895 = vld [vmem:[%s9 + $0xc] sm:$0xf]
    %v896 = vld [vmem:[%s9 + $0x10] sm:$0xf]
    %v897 = vld [vmem:[%s9 + $0x14] sm:$0xf]
    %v898 = vld [vmem:[%s9 + $0x18] sm:$0xf]
    %v899 = vld [vmem:[%s9 + $0x1c] sm:$0xf]
    %v900 = vld [vmem:[%s9 + $0x20] sm:$0xf]
    %v901 = vld [vmem:[%s9 + $0x24] sm:$0xf]
    %v902 = vld [vmem:[%s9 + $0x28] sm:$0xf]
    %v903 = vld [vmem:[%s9 + $0x2c] sm:$0xf]
    %v904 = vld [vmem:[%s9 + $0x30] sm:$0xf]
    %v905 = vld [vmem:[%s9 + $0x34] sm:$0xf]
    %v906 = vld [vmem:[%s9 + $0x38] sm:$0xf]
    %v907 = vld [vmem:[%s9 + $0x3c] sm:$0xf]
    %v908 = vld [vmem:[%s9 + $0x40] sm:$0xf]
    %v909 = vld [vmem:[%s9 + $0x44] sm:$0xf]
    %v910 = vld [vmem:[%s9 + $0x48] sm:$0xf]
    %v911 = vld [vmem:[%s9 + $0x4c] sm:$0xf]
    %v912 = vld [vmem:[%s9 + $0x50] sm:$0xf]
    %v913 = vld [vmem:[%s9 + $0x54] sm:$0xf]
    %v914 = vld [vmem:[%s9 + $0x58] sm:$0xf]
    %v915 = vld [vmem:[%s9 + $0x5c] sm:$0xf]
    %v916 = vld [vmem:[%s9 + $0x60] sm:$0xf]
    %v917 = vld [vmem:[%s9 + $0x64] sm:$0xf]
    %v918 = vld [vmem:[%s9 + $0x68] sm:$0xf]
    %v919 = vld [vmem:[%s9 + $0x6c] sm:$0xf]
    %v920 = vld [vmem:[%s9 + $0x70] sm:$0xf]
    %v921 = vld [vmem:[%s9 + $0x74] sm:$0xf]
    %v922 = vld [vmem:[%s9 + $0x78] sm:$0xf]
    %v923 = vld [vmem:[%s9 + $0x7c] sm:$0xf]
    %v924 = vld [vmem:[%s9 + $0x80] sm:$0xf]
    %v925 = vld [vmem:[%s9 + $0x84] sm:$0xf]
    %v926 = vld [vmem:[%s9 + $0x88] sm:$0xf]
    %v927 = vld [vmem:[%s9 + $0x8c] sm:$0xf]
    %v928 = vld [vmem:[%s9 + $0x90] sm:$0xf]
    %v929 = vld [vmem:[%s9 + $0x94] sm:$0xf]
    %v930 = vld [vmem:[%s9 + $0x98] sm:$0xf]
    %v931 = vld [vmem:[%s9 + $0x9c] sm:$0xf]
    %v932 = vld [vmem:[%s9 + $0xa0] sm:$0xf]
    %v933 = vld [vmem:[%s9 + $0xa4] sm:$0xf]
    %v934 = vld [vmem:[%s9 + $0xa8] sm:$0xf]
    %v935 = vld [vmem:[%s9 + $0xac] sm:$0xf]
    %v936 = vld [vmem:[%s9 + $0xb0] sm:$0xf]
    %v937 = vld [vmem:[%s9 + $0xb4] sm:$0xf]
    %v938 = vld [vmem:[%s9 + $0xb8] sm:$0xf]
    %v939 = vld [vmem:[%s9 + $0xbc] sm:$0xf]
    %v940 = vld [vmem:[%s9 + $0xc0] sm:$0xf]
    %v941 = vld [vmem:[%s9 + $0xc4] sm:$0xf]
    %v942 = vld [vmem:[%s9 + $0xc8] sm:$0xf]
    %v943 = vld [vmem:[%s9 + $0xcc] sm:$0xf]
    %v944 = vld [vmem:[%s9 + $0xd0] sm:$0xf]
    %v945 = vld [vmem:[%s9 + $0xd4] sm:$0xf]
    %v946 = vld [vmem:[%s9 + $0xd8] sm:$0xf]
    %v947 = vld [vmem:[%s9 + $0xdc] sm:$0xf]
    %v948 = vld [vmem:[%s9 + $0xe0] sm:$0xf]
    %v949 = vld [vmem:[%s9 + $0xe4] sm:$0xf]
    %v950 = vld [vmem:[%s9 + $0xe8] sm:$0xf]
    %v951 = vld [vmem:[%s9 + $0xec] sm:$0xf]
    %v952 = vld [vmem:[%s9 + $0xf0] sm:$0xf]
    %v953 = vld [vmem:[%s9 + $0xf4] sm:$0xf]
    %v954 = vld [vmem:[%s9 + $0xf8] sm:$0xf]
    %v955 = vld [vmem:[%s9 + $0xfc] sm:$0xf]
    %v956 = vld [vmem:[%s10] sm:$0x1]
    %v958 = vperm.slane %v956, 0
    %v1024 = vunpack.c.l.b16 %v892
    %v1025 = vunpack.c.l.b16 %v893
    %v1026 = vunpack.c.l.b16 %v894
    %v1027 = vunpack.c.l.b16 %v895
    %v1028 = vunpack.c.l.b16 %v896
    %v1029 = vunpack.c.l.b16 %v897
    %v1030 = vunpack.c.l.b16 %v898
    %v1031 = vunpack.c.l.b16 %v899
    %v1032 = vunpack.c.l.b16 %v900
    %v1033 = vunpack.c.l.b16 %v901
    %v1034 = vunpack.c.l.b16 %v902
    %v1035 = vunpack.c.l.b16 %v903
    %v1036 = vunpack.c.l.b16 %v904
    %v1037 = vunpack.c.l.b16 %v905
    %v1038 = vunpack.c.l.b16 %v906
    %v1039 = vunpack.c.l.b16 %v907
    %v1040 = vunpack.c.l.b16 %v908
    %v1041 = vunpack.c.l.b16 %v909
    %v1042 = vunpack.c.l.b16 %v910
    %v1043 = vunpack.c.l.b16 %v911
    %v1044 = vunpack.c.l.b16 %v912
    %v1045 = vunpack.c.l.b16 %v913
    %v1046 = vunpack.c.l.b16 %v914
    %v1047 = vunpack.c.l.b16 %v915
    %v1048 = vunpack.c.l.b16 %v916
    %v1049 = vunpack.c.l.b16 %v917
    %v1050 = vunpack.c.l.b16 %v918
    %v1051 = vunpack.c.l.b16 %v919
    %v1052 = vunpack.c.l.b16 %v920
    %v1053 = vunpack.c.l.b16 %v921
    %v1054 = vunpack.c.l.b16 %v922
    %v1055 = vunpack.c.l.b16 %v923
    %v1056 = vunpack.c.l.b16 %v924
    %v1057 = vunpack.c.l.b16 %v925
    %v1058 = vunpack.c.l.b16 %v926
    %v1059 = vunpack.c.l.b16 %v927
    %v1060 = vunpack.c.l.b16 %v928
    %v1061 = vunpack.c.l.b16 %v929
    %v1062 = vunpack.c.l.b16 %v930
    %v1063 = vunpack.c.l.b16 %v931
    %v1064 = vunpack.c.l.b16 %v932
    %v1065 = vunpack.c.l.b16 %v933
    %v1066 = vunpack.c.l.b16 %v934
    %v1067 = vunpack.c.l.b16 %v935
    %v1068 = vunpack.c.l.b16 %v936
    %v1069 = vunpack.c.l.b16 %v937
    %v1070 = vunpack.c.l.b16 %v938
    %v1071 = vunpack.c.l.b16 %v939
    %v1072 = vunpack.c.l.b16 %v940
    %v1073 = vunpack.c.l.b16 %v941
    %v1074 = vunpack.c.l.b16 %v942
    %v1075 = vunpack.c.l.b16 %v943
    %v1076 = vunpack.c.l.b16 %v944
    %v1077 = vunpack.c.l.b16 %v945
    %v1078 = vunpack.c.l.b16 %v946
    %v1079 = vunpack.c.l.b16 %v947
    %v1080 = vunpack.c.l.b16 %v948
    %v1081 = vunpack.c.l.b16 %v949
    %v1082 = vunpack.c.l.b16 %v950
    %v1083 = vunpack.c.l.b16 %v951
    %v1084 = vunpack.c.l.b16 %v952
    %v1085 = vunpack.c.l.b16 %v953
    %v1086 = vunpack.c.l.b16 %v954
    %v1087 = vunpack.c.l.b16 %v955
    %v1088 = vpack.c.b16 %v1025, %v1024
    %v1089 = vpack.c.b16 %v1027, %v1026
    %v1090 = vpack.c.b16 %v1029, %v1028
    %v1091 = vpack.c.b16 %v1031, %v1030
    %v1092 = vpack.c.b16 %v1033, %v1032
    %v1093 = vpack.c.b16 %v1035, %v1034
    %v1094 = vpack.c.b16 %v1037, %v1036
    %v1095 = vpack.c.b16 %v1039, %v1038
    %v1096 = vpack.c.b16 %v1041, %v1040
    %v1097 = vpack.c.b16 %v1043, %v1042
    %v1098 = vpack.c.b16 %v1045, %v1044
    %v1099 = vpack.c.b16 %v1047, %v1046
    %v1100 = vpack.c.b16 %v1049, %v1048
    %v1101 = vpack.c.b16 %v1051, %v1050
    %v1102 = vpack.c.b16 %v1053, %v1052
    %v1103 = vpack.c.b16 %v1055, %v1054
    %v1104 = vpack.c.b16 %v1057, %v1056
    %v1105 = vpack.c.b16 %v1059, %v1058
    %v1106 = vpack.c.b16 %v1061, %v1060
    %v1107 = vpack.c.b16 %v1063, %v1062
    %v1108 = vpack.c.b16 %v1065, %v1064
    %v1109 = vpack.c.b16 %v1067, %v1066
    %v1110 = vpack.c.b16 %v1069, %v1068
    %v1111 = vpack.c.b16 %v1071, %v1070
    %v1112 = vpack.c.b16 %v1073, %v1072
    %v1113 = vpack.c.b16 %v1075, %v1074
    %v1114 = vpack.c.b16 %v1077, %v1076
    %v1115 = vpack.c.b16 %v1079, %v1078
    %v1116 = vpack.c.b16 %v1081, %v1080
    %v1117 = vpack.c.b16 %v1083, %v1082
    %v1118 = vpack.c.b16 %v1085, %v1084
    %v1119 = vpack.c.b16 %v1087, %v1086
    %1152 = vmatpush.bf16.msra.mxu0 %v1095
    %1153 = vmatpush.bf16.msra.mxu0 %v1094
    %1154 = vmatpush.bf16.msra.mxu0 %v1093
    %1155 = vmatpush.bf16.msra.mxu0 %v1092
    %1156 = vmatpush.bf16.msra.mxu0 %v1091
    %1157 = vmatpush.bf16.msra.mxu0 %v1090
    %1158 = vmatpush.bf16.msra.mxu0 %v1089
    %1159 = vmatpush.bf16.msra.mxu0 %v1088
    %1160 = vmatmul.bf16.gmra.mxu0 %v884
    %v1161 = vpop.f32.mrf.mxu0
    %v1162 = vadd.f32 %v958, %v1161
    %v1163 = vpop.f32.mrf.mxu0
    %v1164 = vadd.f32 %v958, %v1163
    %1165 = vmatmul.bf16.gmra.mxu0 %v888
    %v1166 = vpop.f32.mrf.mxu0
    %v1167 = vadd.f32 %v958, %v1166
    %v1168 = vpop.f32.mrf.mxu0
    %v1169 = vadd.f32 %v958, %v1168
    %1170 = vdwg.mxu0
    %1171 = vmatpush.bf16.msra.mxu0 %v1103
    %1172 = vmatpush.bf16.msra.mxu0 %v1102
    %1173 = vmatpush.bf16.msra.mxu0 %v1101
    %1174 = vmatpush.bf16.msra.mxu0 %v1100
    %1175 = vmatpush.bf16.msra.mxu0 %v1099
    %1176 = vmatpush.bf16.msra.mxu0 %v1098
    %1177 = vmatpush.bf16.msra.mxu0 %v1097
    %1178 = vmatpush.bf16.msra.mxu0 %v1096
    %1179 = vmatmul.bf16.gmra.mxu0 %v885
    %v1180 = vpop.f32.mrf.mxu0
    %v1181 = vadd.f32 %v1162, %v1180
    %v1182 = vpop.f32.mrf.mxu0
    %v1183 = vadd.f32 %v1164, %v1182
    %1184 = vmatmul.bf16.gmra.mxu0 %v889
    %v1185 = vpop.f32.mrf.mxu0
    %v1186 = vadd.f32 %v1167, %v1185
    %v1187 = vpop.f32.mrf.mxu0
    %v1188 = vadd.f32 %v1169, %v1187
    %1189 = vdwg.mxu0
    %1190 = vmatpush.bf16.msra.mxu0 %v1111
    %1191 = vmatpush.bf16.msra.mxu0 %v1110
    %1192 = vmatpush.bf16.msra.mxu0 %v1109
    %1193 = vmatpush.bf16.msra.mxu0 %v1108
    %1194 = vmatpush.bf16.msra.mxu0 %v1107
    %1195 = vmatpush.bf16.msra.mxu0 %v1106
    %1196 = vmatpush.bf16.msra.mxu0 %v1105
    %1197 = vmatpush.bf16.msra.mxu0 %v1104
    %1198 = vmatmul.bf16.gmra.mxu0 %v886
    %v1199 = vpop.f32.mrf.mxu0
    %v1200 = vadd.f32 %v1181, %v1199
    %v1201 = vpop.f32.mrf.mxu0
    %v1202 = vadd.f32 %v1183, %v1201
    %1203 = vmatmul.bf16.gmra.mxu0 %v890
    %v1204 = vpop.f32.mrf.mxu0
    %v1205 = vadd.f32 %v1186, %v1204
    %v1206 = vpop.f32.mrf.mxu0
    %v1207 = vadd.f32 %v1188, %v1206
    %1208 = vdwg.mxu0
    %1209 = vmatpush.bf16.msra.mxu0 %v1119
    %1210 = vmatpush.bf16.msra.mxu0 %v1118
    %1211 = vmatpush.bf16.msra.mxu0 %v1117
    %1212 = vmatpush.bf16.msra.mxu0 %v1116
    %1213 = vmatpush.bf16.msra.mxu0 %v1115
    %1214 = vmatpush.bf16.msra.mxu0 %v1114
    %1215 = vmatpush.bf16.msra.mxu0 %v1113
    %1216 = vmatpush.bf16.msra.mxu0 %v1112
    %1217 = vmatmul.bf16.gmra.mxu0 %v887
    %v1218 = vpop.f32.mrf.mxu0
    %v1219 = vadd.f32 %v1200, %v1218
    %v1220 = vpop.f32.mrf.mxu0
    %v1221 = vadd.f32 %v1202, %v1220
    %1222 = vmatmul.bf16.gmra.mxu0 %v891
    %v1223 = vpop.f32.mrf.mxu0
    %v1224 = vadd.f32 %v1205, %v1223
    %v1225 = vpop.f32.mrf.mxu0
    %v1226 = vadd.f32 %v1207, %v1225
    %1227 = vdwg.mxu0
    %1228 = vst.msk [vmem:[%s11] sm:$0xff] %vm66, %v1219
    %1229 = vst.msk [vmem:[%s11 + $0x8] sm:$0xff] %vm66, %v1221
    %1230 = vst.msk [vmem:[%s11 + $0x10] sm:$0xff] %vm66, %v1224
    %1231 = vst.msk [vmem:[%s11 + $0x18] sm:$0xff] %vm66, %v1226
    // Predicated region
    $region50: #{tpu_custom_call.1} parent=1 // pred_check
      _
    $region51: #{tpu_custom_call.1} parent=1 // pred_check_branch
      %1233 = sbr.rel (0) target = $region53
    $region52: #{tpu_custom_call.1} parent=1 // pred_region
      _
    $region53: #{tpu_custom_call.1} parent=1 // pred_fallthru
      _
    // Predicated region
    $region54: #{tpu_custom_call.1} parent=1 // pred_check
      _
    $region55: #{tpu_custom_call.1} parent=1 // pred_check_branch
      %1235 = sbr.rel (0) target = $region57
    $region56: #{tpu_custom_call.1} parent=1 // pred_region
      _
    $region57: #{tpu_custom_call.1} parent=1 // pred_fallthru
      _
    %1236 = vsyncpa [#allocation3], 1

</llo_original>
